<compile_context>
chip_gen: v5e
topology: v5e:2x2
jax: 0.10.0
libtpu: 0.0.40
codegen_flags: <defaults>
</compile_context>

<pallas_src>
import functools

import jax
import jax.numpy as jnp
import numpy as np
from jax.experimental import pallas as pl
from jax.experimental.pallas import tpu as pltpu


# ---------------------------------------------------------------- hardware-aware config
def _vmem_limit_bytes():
    # ~0.75x physical VMEM: ~48 MiB on v7x (64 MiB/TC), ~96 MiB on v5e/v6e (128 MiB).
    try:
        return int(pltpu.get_tpu_info().vmem_capacity_bytes * 3 // 4)
    except Exception:
        return 48 * 1024 * 1024


_VMEM_LIMIT = _vmem_limit_bytes()

# Whether pipeline_mode=pl.Buffered(1) (single-buffered constant blocks) works
# in this JAX build; resolved once by probe_buffered_one() in __main__, OUTSIDE
# any jit trace.  Default False => plain (double-buffered) specs.
_BUFFERED_OK = False


def probe_buffered_one():
    """Tiny eager pallas_call to verify pl.Buffered(1) is accepted by this build."""
    global _BUFFERED_OK
    try:
        def _probe(x_ref, o_ref):
            o_ref[...] = x_ref[...] + 1.0

        out = pl.pallas_call(
            _probe,
            grid=(2,),
            in_specs=[pl.BlockSpec((8, 128), lambda i: (0, 0),
                                   pipeline_mode=pl.Buffered(1))],
            out_specs=pl.BlockSpec((8, 128), lambda i: (0, 0)),
            out_shape=jax.ShapeDtypeStruct((8, 128), jnp.float32),
        )(jnp.zeros((8, 128), jnp.float32))
        jax.block_until_ready(out)
        _BUFFERED_OK = True
    except Exception:
        _BUFFERED_OK = False
    return _BUFFERED_OK


# ---------------------------------------------------------------- tiling helpers
def _round_up(n, m):
    return ((n + m - 1) // m) * m


def _choose_tm(n_rows):
    """Row-tile: big tiles amortize per-grid-step overhead and feed full MXU
    passes, chosen from {128,256,512} minimizing tail-pad waste (ties -> larger).
    >=16 so bf16 row blocks fill whole sublane-packed vregs at tiny sizes."""
    if n_rows <= 128:
        return max(16, pl.next_power_of_2(n_rows))
    best_tm, best_pad = 128, None
    for tm in (512, 256, 128):          # ties prefer the larger tile
        pad = _round_up(n_rows, tm)
        if best_pad is None or pad < best_pad:
            best_tm, best_pad = tm, pad
    return best_tm


def _choose_tk(d):
    """Contraction-dim tile: full D when small, else <=512-wide chunks so the
    per-step weight tiles stay bounded (needed at D>=2048 on v7x's 64 MiB VMEM,
    with weights replicated on both TCs under megacore row sharding)."""
    if d <= 1024:
        return d
    for tk in (512, 256, 128):
        if d % tk == 0:
            return tk
    return d


def _pad_rows(a, n_pad):
    n = a.shape[0]
    return a if n_pad == n else jnp.pad(a, ((0, n_pad - n), (0, 0)))


def _spec(shape, index_map, resident=False):
    """BlockSpec; resident=True marks a block whose index never changes, so one
    VMEM buffer suffices (halves weight VMEM vs. default double-buffering)."""
    if resident and _BUFFERED_OK:
        return pl.BlockSpec(shape, index_map, pipeline_mode=pl.Buffered(1))
    return pl.BlockSpec(shape, index_map)


# ---------------------------------------------------------------- Pallas kernels
def _z_kernel(x_ref, wz_ref, wza_ref, bz_ref, bza_ref, z_ref, accz_ref, acca_ref):
    """z = fc_z(x) * SiLU(fc_z_act(x)); K-tiled with f32 VMEM accumulators.
    Two separate lane-aligned matmuls (no non-128 lane-offset slicing)."""
    k = pl.program_id(1)

    @pl.when(k == 0)
    def _():
        accz_ref[...] = jnp.zeros_like(accz_ref)
        acca_ref[...] = jnp.zeros_like(acca_ref)

    x = x_ref[...]                                                    # (TM, TK) bf16
    accz_ref[...] += jnp.dot(x, wz_ref[...], preferred_element_type=jnp.float32)
    acca_ref[...] += jnp.dot(x, wza_ref[...], preferred_element_type=jnp.float32)

    @pl.when(k == pl.num_programs(1) - 1)
    def _():
        zl = accz_ref[...] + bz_ref[...]                              # fc_z(x)
        za = acca_ref[...] + bza_ref[...]                             # fc_z_act(x)
        z_ref[...] = zl * (za * jax.nn.sigmoid(za))                   # f32 SiLU gate


def _out_kernel(h_ref, x_ref, wy_ref, wya_ref, by_ref, bya_ref, nw_ref,
                y_ref, accy_ref, accg_ref, ss_ref, *, inv_d, eps):
    """y = fc_y(RMSNorm(h.real)) * SiLU(fc_y_act(x)).

    RMSNorm folds into the K loop: the per-row rsqrt scale commutes with the
    linear fc_y matmul, so accumulate (h*norm_w) @ Wy and sum(h^2) per row and
    apply rsqrt + bias + gate only at the final K step."""
    k = pl.program_id(1)

    @pl.when(k == 0)
    def _():
        accy_ref[...] = jnp.zeros_like(accy_ref)
        accg_ref[...] = jnp.zeros_like(accg_ref)
        ss_ref[...] = jnp.zeros_like(ss_ref)

    h = h_ref[...]                                                    # (TM, TK) f32 == h.real chunk
    ss_ref[...] += jnp.sum(h * h, axis=-1, keepdims=True)
    hw = (h * nw_ref[...]).astype(jnp.bfloat16)
    accy_ref[...] += jnp.dot(hw, wy_ref[...], preferred_element_type=jnp.float32)
    accg_ref[...] += jnp.dot(x_ref[...], wya_ref[...], preferred_element_type=jnp.float32)

    @pl.when(k == pl.num_programs(1) - 1)
    def _():
        scale = jax.lax.rsqrt(ss_ref[...] * inv_d + eps)              # RMSNorm rsqrt (f32)
        y_lin = accy_ref[...] * scale + by_ref[...]                   # fc_y(norm(h))
        g = accg_ref[...] + bya_ref[...]                              # fc_y_act(x)
        y_ref[...] = (y_lin * (g * jax.nn.sigmoid(g))).astype(y_ref.dtype)


# ---------------------------------------------------------------- pallas_call wrappers
def _z_call(x_bf, wz, wza, bz, bza, tm, tk):
    n_pad, d = x_bf.shape
    nk = d // tk
    row_k = pl.BlockSpec((tm, tk), lambda i, k: (i, k))
    w_spec = _spec((tk, d), lambda i, k: (k, 0), resident=(nk == 1))
    b_spec = _spec((1, d), lambda i, k: (0, 0), resident=True)
    cost = pl.CostEstimate(
        flops=int(4 * n_pad * d * d + 6 * n_pad * d),
        transcendentals=int(n_pad * d),
        bytes_accessed=int(2 * n_pad * d + 4 * d * d + 8 * d + 4 * n_pad * d),
    )
    return pl.pallas_call(
        _z_kernel,
        grid=(n_pad // tm, nk),
        in_specs=[row_k, w_spec, w_spec, b_spec, b_spec],
        out_specs=pl.BlockSpec((tm, d), lambda i, k: (i, 0)),
        out_shape=jax.ShapeDtypeStruct((n_pad, d), jnp.float32),
        scratch_shapes=[pltpu.VMEM((tm, d), jnp.float32),
                        pltpu.VMEM((tm, d), jnp.float32)],
        compiler_params=pltpu.CompilerParams(
            dimension_semantics=("parallel", "arbitrary"),
            vmem_limit_bytes=_VMEM_LIMIT),
        cost_estimate=cost,
    )(x_bf, wz, wza, bz, bza)


def _out_call(h_pad, x_bf, wy, wya, by, bya, norm_w, tm, tk, out_dtype):
    n_pad, d = h_pad.shape
    nk = d // tk
    row_k = pl.BlockSpec((tm, tk), lambda i, k: (i, k))
    w_spec = _spec((tk, d), lambda i, k: (k, 0), resident=(nk == 1))
    b_spec = _spec((1, d), lambda i, k: (0, 0), resident=True)
    nw_spec = _spec((1, tk), lambda i, k: (0, k), resident=(nk == 1))
    out_bytes = n_pad * d * jnp.dtype(out_dtype).itemsize
    cost = pl.CostEstimate(
        flops=int(4 * n_pad * d * d + 12 * n_pad * d),
        transcendentals=int(n_pad * d + n_pad),
        bytes_accessed=int(4 * n_pad * d + 2 * n_pad * d + 4 * d * d + 12 * d + out_bytes),
    )
    kernel = functools.partial(_out_kernel, inv_d=1.0 / d, eps=1e-6)
    return pl.pallas_call(
        kernel,
        grid=(n_pad // tm, nk),
        in_specs=[row_k, row_k, w_spec, w_spec, b_spec, b_spec, nw_spec],
        out_specs=pl.BlockSpec((tm, d), lambda i, k: (i, 0)),
        out_shape=jax.ShapeDtypeStruct((n_pad, d), out_dtype),
        scratch_shapes=[pltpu.VMEM((tm, d), jnp.float32),
                        pltpu.VMEM((tm, d), jnp.float32),
                        pltpu.VMEM((tm, 1), jnp.float32)],
        compiler_params=pltpu.CompilerParams(
            dimension_semantics=("parallel", "arbitrary"),
            vmem_limit_bytes=_VMEM_LIMIT),
        cost_estimate=cost,
    )(h_pad, x_bf, wy, wya, by, bya, norm_w)


# ---------------------------------------------------------------- full forward
@jax.jit
def sconv_forward(x, kp):
    B, L, D = x.shape
    N = B * L
    tm = _choose_tm(N)
    tk = _choose_tk(D)
    n_pad = _round_up(N, tm)

    # Cast straight to bf16 for the MXU (no f32 wrapper copy); pad tail rows so
    # none are dropped (padded rows are sliced off before the FFT / output).
    x_bf = _pad_rows(x.reshape(N, D).astype(jnp.bfloat16), n_pad)

    # kernel 1: z = fc_z(x) * SiLU(fc_z_act(x))   (f32 output feeds the FFT)
    z = _z_call(x_bf, kp["wz"], kp["wza"], kp["bz"], kp["bza"], tm, tk)[:N]
    z = z.reshape(B, L, D)

    # TODO(synk): torch.fft.fft / ifft have no Pallas TPU equivalent; the complex
    # convolution glue stays in plain JAX (phazor tables precomputed per L in
    # prepare_kernel_params, so no per-call FFT of the phazor kernel).
    z_fft = jnp.fft.fft(z, n=2 * L, axis=1)                          # f32 -> c64 inside the FFT
    # NOTE: the reference module takes ifft over dim=0 (the batch axis); reproduced faithfully.
    h_inner = jnp.fft.ifft(z_fft * kp["phazor_prog_fft"][None, :, :], axis=0)[:, :L, :]
    last_conv = jnp.broadcast_to(kp["last_conv_init"][None, :], (B, D))   # first call: init state
    h_cross = jnp.einsum("bd,ld,d->bld", last_conv, kp["phazor_prog"], kp["phazor_decay"])
    h_real = jnp.real(h_inner + h_cross).reshape(N, D)               # real(c64) is already f32
    h_pad = _pad_rows(h_real, n_pad)

    # kernel 2: y = fc_y(RMSNorm(h.real)) * SiLU(fc_y_act(x)), stored in x.dtype
    y = _out_call(h_pad, x_bf, kp["wy"], kp["wya"], kp["by"], kp["bya"],
                  kp["norm_w"], tm, tk, x.dtype)[:N]
    return y.reshape(B, L, D)


# ---------------------------------------------------------------- pure-JAX reference (for sanity)
def sconv_reference(x, params):
    B, L, D = x.shape
    xf = x.astype(jnp.float32)
    z = (xf @ params["wz_t"] + params["bz"]) * jax.nn.silu(xf @ params["wza_t"] + params["bza"])
    ln_phazor = params["phazor_angle_scale"] * 1j - 1e-5
    l_idx = jnp.arange(L, dtype=jnp.float32).astype(jnp.complex64)
    phazor_prog = jnp.exp(l_idx[:, None] * ln_phazor[None, :])
    h_inner = jnp.fft.ifft(jnp.fft.fft(z.astype(jnp.complex64), n=2 * L, axis=1)
                           * jnp.fft.fft(phazor_prog, n=2 * L, axis=0)[None], axis=0)[:, :L, :]
    last_conv = jnp.broadcast_to(params["last_conv_init"][None, :], (B, D))
    h_cross = jnp.einsum("bd,ld,d->bld", last_conv, phazor_prog, jnp.exp(ln_phazor))
    h = jnp.real(h_inner + h_cross)
    hn = h * jax.lax.rsqrt(jnp.mean(h * h, -1, keepdims=True) + 1e-6) * params["norm_w"][0]
    y = (hn @ params["wy_t"] + params["by"]) * jax.nn.silu(xf @ params["wya_t"] + params["bya"])
    return y.astype(x.dtype)


# ---------------------------------------------------------------- deterministic init
def init_params(key, D):
    ks = jax.random.split(key, 8)
    std = 0.01 * np.sqrt(2.0 / (2.0 * D))  # xavier_normal_ with gain=0.01, square weight

    def lin_w_t(k):  # pre-transposed Linear weight (in, out)
        return jax.random.normal(k, (D, D), jnp.float32) * std

    zeros_b = jnp.zeros((1, D), jnp.float32)
    return {
        "wz_t": lin_w_t(ks[0]), "bz": zeros_b,
        "wza_t": lin_w_t(ks[1]), "bza": zeros_b,
        "wy_t": lin_w_t(ks[2]), "by": zeros_b,
        "wya_t": lin_w_t(ks[3]), "bya": zeros_b,
        "norm_w": jnp.ones((1, D), jnp.float32),
        "phazor_angle_scale": jnp.power(0.001, jnp.linspace(0.0, 1.0, D)).astype(jnp.float32),
        "last_conv_init": (jax.random.normal(ks[4], (D,), jnp.float32)
                           + 1j * jax.random.normal(ks[5], (D,), jnp.float32)).astype(jnp.complex64),
    }


def prepare_kernel_params(params, L):
    """Kernel-ready params: bf16 MXU weights, f32 biases, and the phazor tables
    (phazor_prog, its FFT, exp(ln_phazor)) precomputed once per sequence length."""
    ln_phazor = params["phazor_angle_scale"] * 1j - 1e-5                     # (D,) c64
    l_idx = jnp.arange(L, dtype=jnp.float32).astype(jnp.complex64)
    phazor_prog = jnp.exp(l_idx[:, None] * ln_phazor[None, :])               # (L, D) c64
    return {
        "wz": params["wz_t"].astype(jnp.bfloat16), "bz": params["bz"],
        "wza": params["wza_t"].astype(jnp.bfloat16), "bza": params["bza"],
        "wy": params["wy_t"].astype(jnp.bfloat16), "by": params["by"],
        "wya": params["wya_t"].astype(jnp.bfloat16), "bya": params["bya"],
        "norm_w": params["norm_w"],
        "phazor_prog": phazor_prog,
        "phazor_prog_fft": jnp.fft.fft(phazor_prog, n=2 * L, axis=0),        # (2L, D) c64
        "phazor_decay": jnp.exp(ln_phazor),                                  # (D,) c64
        "last_conv_init": params["last_conv_init"],
    }


if __name__ == "__main__":
    probe_buffered_one()   # resolve pl.Buffered(1) support once, outside any jit trace

    key = jax.random.PRNGKey(0)
    k_x, k_p = jax.random.split(key)

    # Small primary shape, a ragged shape (B*L not a multiple of the row tile)
    # exercising tail padding, and a 128-lane-aligned D exercising the
    # production (D % 128 == 0) layout.
    for (B, L, D) in [(2, 8, 32), (3, 5, 32), (2, 16, 128)]:
        x = jax.random.normal(k_x, (B, L, D), jnp.float32)
        params = init_params(k_p, D)
        kparams = prepare_kernel_params(params, L)

        y = jax.block_until_ready(sconv_forward(x, kparams))
        y_ref = jax.block_until_ready(sconv_reference(x, params))

        assert y.shape == (B, L, D) and y.dtype == x.dtype
        assert bool(jnp.all(jnp.isfinite(y)))
        # bf16 MXU inputs (f32 accumulation) vs pure-f32 reference -> loosened tolerance.
        np.testing.assert_allclose(np.asarray(y), np.asarray(y_ref), rtol=2e-2, atol=2e-5)

    print("KERNEL_OK")
</pallas_src>

<mosaic_0001>
module attributes {stable_mosaic.version = 11 : i64} {
  func.func @_probe(%arg0: i32, %arg1: memref<8x128xf32, #tpu.memory_space<vmem>>, %arg2: memref<8x128xf32, #tpu.memory_space<vmem>>) attributes {dimension_semantics = [#tpu.dimension_semantics<arbitrary>], iteration_bounds = array<i64: 2>, scalar_prefetch = 0 : i64, scratch_operands = 0 : i64, tpu.core_type = #tpu.core_type<tc>, window_params = [{pipeline_mode = #tpu.pipeline_mode<synchronous>, transform_indices = @transform_0, window_bounds = array<i64: 8, 128>}, {pipeline_mode = #tpu.pipeline_mode<synchronous>, transform_indices = @transform_1, window_bounds = array<i64: 8, 128>}]} {
    %c0 = arith.constant 0 : index
    %c0_0 = arith.constant 0 : index
    %0 = vector.load %arg1[%c0, %c0_0] : memref<8x128xf32, #tpu.memory_space<vmem>>, vector<8x128xf32>
    %cst = arith.constant 1.000000e+00 : f32
    %1 = vector.broadcast %cst : f32 to vector<8x128xf32>
    %2 = arith.addf %0, %1 : vector<8x128xf32>
    %c0_1 = arith.constant 0 : index
    %c0_2 = arith.constant 0 : index
    %3 = vector.load %arg2[%c0_1, %c0_2] : memref<8x128xf32, #tpu.memory_space<vmem>>, vector<8x128xf32>
    tpu.vector_store %arg2[%c0_1, %c0_2], %2 {strides = array<i32>} : memref<8x128xf32, #tpu.memory_space<vmem>>, vector<8x128xf32>,
    return
  }
  func.func @transform_0(%arg0: i32) -> (i32, i32) {
    %c0_i32 = arith.constant 0 : i32
    %c0_i32_0 = arith.constant 0 : i32
    %c0_i32_1 = arith.constant 0 : i32
    return %c0_i32, %c0_i32_0 : i32, i32
  }
  func.func @transform_1(%arg0: i32) -> (i32, i32) {
    %c0_i32 = arith.constant 0 : i32
    %c0_i32_0 = arith.constant 0 : i32
    %c0_i32_1 = arith.constant 0 : i32
    return %c0_i32, %c0_i32_0 : i32, i32
  }
}

module attributes {stable_mosaic.version = 11 : i64} {
  func.func @_z_kernel(%arg0: i32, %arg1: i32, %arg2: memref<16x32xbf16, #tpu.memory_space<vmem>>, %arg3: memref<32x32xbf16, #tpu.memory_space<vmem>>, %arg4: memref<32x32xbf16, #tpu.memory_space<vmem>>, %arg5: memref<1x32xf32, #tpu.memory_space<vmem>>, %arg6: memref<1x32xf32, #tpu.memory_space<vmem>>, %arg7: memref<16x32xf32, #tpu.memory_space<vmem>>, %arg8: memref<16x32xf32, #tpu.memory_space<vmem>>, %arg9: memref<16x32xf32, #tpu.memory_space<vmem>>) attributes {dimension_semantics = [#tpu.dimension_semantics<parallel>, #tpu.dimension_semantics<arbitrary>], iteration_bounds = array<i64: 1, 1>, scalar_prefetch = 0 : i64, scratch_operands = 2 : i64, tpu.core_type = #tpu.core_type<tc>, window_params = [{transform_indices = @transform_0, window_bounds = array<i64: 16, 32>}, {transform_indices = @transform_1, window_bounds = array<i64: 32, 32>}, {transform_indices = @transform_2, window_bounds = array<i64: 32, 32>}, {pipeline_mode = #tpu.pipeline_mode<synchronous>, transform_indices = @transform_3, window_bounds = array<i64: 1, 32>}, {pipeline_mode = #tpu.pipeline_mode<synchronous>, transform_indices = @transform_4, window_bounds = array<i64: 1, 32>}, {transform_indices = @transform_5, window_bounds = array<i64: 16, 32>}]} {
    %c0_i32 = arith.constant 0 : i32
    %0 = arith.cmpi eq, %arg1, %c0_i32 : i32
    %1 = arith.extui %0 : i1 to i32
    %c0_i32_0 = arith.constant 0 : i32
    %2 = arith.cmpi ne, %1, %c0_i32_0 : i32
    scf.if %2 {
      %cst_17 = arith.constant 0.000000e+00 : f32
      %17 = vector.broadcast %cst_17 : f32 to vector<16x32xf32>
      %c0_18 = arith.constant 0 : index
      %c0_19 = arith.constant 0 : index
      %18 = vector.load %arg8[%c0_18, %c0_19] : memref<16x32xf32, #tpu.memory_space<vmem>>, vector<16x32xf32>
      tpu.vector_store %arg8[%c0_18, %c0_19], %17 {strides = array<i32>} : memref<16x32xf32, #tpu.memory_space<vmem>>, vector<16x32xf32>,
      %cst_20 = arith.constant 0.000000e+00 : f32
      %19 = vector.broadcast %cst_20 : f32 to vector<16x32xf32>
      %c0_21 = arith.constant 0 : index
      %c0_22 = arith.constant 0 : index
      %20 = vector.load %arg9[%c0_21, %c0_22] : memref<16x32xf32, #tpu.memory_space<vmem>>, vector<16x32xf32>
      tpu.vector_store %arg9[%c0_21, %c0_22], %19 {strides = array<i32>} : memref<16x32xf32, #tpu.memory_space<vmem>>, vector<16x32xf32>,
    } else {
    }
    %c0 = arith.constant 0 : index
    %c0_1 = arith.constant 0 : index
    %3 = vector.load %arg2[%c0, %c0_1] : memref<16x32xbf16, #tpu.memory_space<vmem>>, vector<16x32xbf16>
    %c0_2 = arith.constant 0 : index
    %c0_3 = arith.constant 0 : index
    %4 = vector.load %arg8[%c0_2, %c0_3] : memref<16x32xf32, #tpu.memory_space<vmem>>, vector<16x32xf32>
    %c0_4 = arith.constant 0 : index
    %c0_5 = arith.constant 0 : index
    %5 = vector.load %arg3[%c0_4, %c0_5] : memref<32x32xbf16, #tpu.memory_space<vmem>>, vector<32x32xbf16>
    %cst = arith.constant dense<0.000000e+00> : vector<16x32xf32>
    %6 = tpu.matmul %3, %5, %cst {dimension_numbers = #tpu.dot_dimension_numbers<[1], [0], [0], [1], [0, 0, 1, 1], [], []>} : vector<16x32xbf16>, vector<32x32xbf16>, vector<16x32xf32> -> vector<16x32xf32>
    %7 = arith.addf %4, %6 : vector<16x32xf32>
    %c0_6 = arith.constant 0 : index
    %c0_7 = arith.constant 0 : index
    %8 = vector.load %arg8[%c0_6, %c0_7] : memref<16x32xf32, #tpu.memory_space<vmem>>, vector<16x32xf32>
    tpu.vector_store %arg8[%c0_6, %c0_7], %7 {strides = array<i32>} : memref<16x32xf32, #tpu.memory_space<vmem>>, vector<16x32xf32>,
    %c0_8 = arith.constant 0 : index
    %c0_9 = arith.constant 0 : index
    %9 = vector.load %arg9[%c0_8, %c0_9] : memref<16x32xf32, #tpu.memory_space<vmem>>, vector<16x32xf32>
    %c0_10 = arith.constant 0 : index
    %c0_11 = arith.constant 0 : index
    %10 = vector.load %arg4[%c0_10, %c0_11] : memref<32x32xbf16, #tpu.memory_space<vmem>>, vector<32x32xbf16>
    %cst_12 = arith.constant dense<0.000000e+00> : vector<16x32xf32>
    %11 = tpu.matmul %3, %10, %cst_12 {dimension_numbers = #tpu.dot_dimension_numbers<[1], [0], [0], [1], [0, 0, 1, 1], [], []>} : vector<16x32xbf16>, vector<32x32xbf16>, vector<16x32xf32> -> vector<16x32xf32>
    %12 = arith.addf %9, %11 : vector<16x32xf32>
    %c0_13 = arith.constant 0 : index
    %c0_14 = arith.constant 0 : index
    %13 = vector.load %arg9[%c0_13, %c0_14] : memref<16x32xf32, #tpu.memory_space<vmem>>, vector<16x32xf32>
    tpu.vector_store %arg9[%c0_13, %c0_14], %12 {strides = array<i32>} : memref<16x32xf32, #tpu.memory_space<vmem>>, vector<16x32xf32>,
    %c0_i32_15 = arith.constant 0 : i32
    %14 = arith.cmpi eq, %arg1, %c0_i32_15 : i32
    %15 = arith.extui %14 : i1 to i32
    %c0_i32_16 = arith.constant 0 : i32
    %16 = arith.cmpi ne, %15, %c0_i32_16 : i32
    scf.if %16 {
      %c0_17 = arith.constant 0 : index
      %c0_18 = arith.constant 0 : index
      %17 = vector.load %arg8[%c0_17, %c0_18] : memref<16x32xf32, #tpu.memory_space<vmem>>, vector<16x32xf32>
      %c0_19 = arith.constant 0 : index
      %c0_20 = arith.constant 0 : index
      %18 = vector.load %arg5[%c0_19, %c0_20] : memref<1x32xf32, #tpu.memory_space<vmem>>, vector<1x32xf32>
      %19 = vector.broadcast %18 : vector<1x32xf32> to vector<16x32xf32>
      %20 = arith.addf %17, %19 : vector<16x32xf32>
      %c0_21 = arith.constant 0 : index
      %c0_22 = arith.constant 0 : index
      %21 = vector.load %arg9[%c0_21, %c0_22] : memref<16x32xf32, #tpu.memory_space<vmem>>, vector<16x32xf32>
      %c0_23 = arith.constant 0 : index
      %c0_24 = arith.constant 0 : index
      %22 = vector.load %arg6[%c0_23, %c0_24] : memref<1x32xf32, #tpu.memory_space<vmem>>, vector<1x32xf32>
      %23 = vector.broadcast %22 : vector<1x32xf32> to vector<16x32xf32>
      %24 = arith.addf %21, %23 : vector<16x32xf32>
      %25 = arith.negf %24 : vector<16x32xf32>
      %26 = math.exp %25 : vector<16x32xf32>
      %cst_25 = arith.constant 1.000000e+00 : f32
      %27 = vector.broadcast %cst_25 : f32 to vector<16x32xf32>
      %28 = arith.addf %27, %26 : vector<16x32xf32>
      %29 = arith.divf %27, %28 : vector<16x32xf32>
      %30 = arith.mulf %24, %29 : vector<16x32xf32>
      %31 = arith.mulf %20, %30 : vector<16x32xf32>
      %c0_26 = arith.constant 0 : index
      %c0_27 = arith.constant 0 : index
      %32 = vector.load %arg7[%c0_26, %c0_27] : memref<16x32xf32, #tpu.memory_space<vmem>>, vector<16x32xf32>
      tpu.vector_store %arg7[%c0_26, %c0_27], %31 {strides = array<i32>} : memref<16x32xf32, #tpu.memory_space<vmem>>, vector<16x32xf32>,
    } else {
    }
    return
  }
  func.func @transform_0(%arg0: i32, %arg1: i32) -> (i32, i32) {
    %c0_i32 = arith.constant 0 : i32
    return %arg0, %arg1 : i32, i32
  }
  func.func @transform_1(%arg0: i32, %arg1: i32) -> (i32, i32) {
    %c0_i32 = arith.constant 0 : i32
    %c0_i32_0 = arith.constant 0 : i32
    return %arg1, %c0_i32 : i32, i32
  }
  func.func @transform_2(%arg0: i32, %arg1: i32) -> (i32, i32) {
    %c0_i32 = arith.constant 0 : i32
    %c0_i32_0 = arith.constant 0 : i32
    return %arg1, %c0_i32 : i32, i32
  }
  func.func @transform_3(%arg0: i32, %arg1: i32) -> (i32, i32) {
    %c0_i32 = arith.constant 0 : i32
    %c0_i32_0 = arith.constant 0 : i32
    %c0_i32_1 = arith.constant 0 : i32
    return %c0_i32, %c0_i32_0 : i32, i32
  }
  func.func @transform_4(%arg0: i32, %arg1: i32) -> (i32, i32) {
    %c0_i32 = arith.constant 0 : i32
    %c0_i32_0 = arith.constant 0 : i32
    %c0_i32_1 = arith.constant 0 : i32
    return %c0_i32, %c0_i32_0 : i32, i32
  }
  func.func @transform_5(%arg0: i32, %arg1: i32) -> (i32, i32) {
    %c0_i32 = arith.constant 0 : i32
    %c0_i32_0 = arith.constant 0 : i32
    return %arg0, %c0_i32 : i32, i32
  }
}

module attributes {stable_mosaic.version = 11 : i64} {
  func.func @_out_kernel(%arg0: i32, %arg1: i32, %arg2: memref<16x32xf32, #tpu.memory_space<vmem>>, %arg3: memref<16x32xbf16, #tpu.memory_space<vmem>>, %arg4: memref<32x32xbf16, #tpu.memory_space<vmem>>, %arg5: memref<32x32xbf16, #tpu.memory_space<vmem>>, %arg6: memref<1x32xf32, #tpu.memory_space<vmem>>, %arg7: memref<1x32xf32, #tpu.memory_space<vmem>>, %arg8: memref<1x32xf32, #tpu.memory_space<vmem>>, %arg9: memref<16x32xf32, #tpu.memory_space<vmem>>, %arg10: memref<16x32xf32, #tpu.memory_space<vmem>>, %arg11: memref<16x32xf32, #tpu.memory_space<vmem>>, %arg12: memref<16x1xf32, #tpu.memory_space<vmem>>) attributes {dimension_semantics = [#tpu.dimension_semantics<parallel>, #tpu.dimension_semantics<arbitrary>], iteration_bounds = array<i64: 1, 1>, scalar_prefetch = 0 : i64, scratch_operands = 3 : i64, tpu.core_type = #tpu.core_type<tc>, window_params = [{transform_indices = @transform_0, window_bounds = array<i64: 16, 32>}, {transform_indices = @transform_1, window_bounds = array<i64: 16, 32>}, {transform_indices = @transform_2, window_bounds = array<i64: 32, 32>}, {transform_indices = @transform_3, window_bounds = array<i64: 32, 32>}, {pipeline_mode = #tpu.pipeline_mode<synchronous>, transform_indices = @transform_4, window_bounds = array<i64: 1, 32>}, {pipeline_mode = #tpu.pipeline_mode<synchronous>, transform_indices = @transform_5, window_bounds = array<i64: 1, 32>}, {transform_indices = @transform_6, window_bounds = array<i64: 1, 32>}, {transform_indices = @transform_7, window_bounds = array<i64: 16, 32>}]} {
    %c0_i32 = arith.constant 0 : i32
    %0 = arith.cmpi eq, %arg1, %c0_i32 : i32
    %1 = arith.extui %0 : i1 to i32
    %c0_i32_0 = arith.constant 0 : i32
    %2 = arith.cmpi ne, %1, %c0_i32_0 : i32
    scf.if %2 {
      %cst_26 = arith.constant 0.000000e+00 : f32
      %28 = vector.broadcast %cst_26 : f32 to vector<16x32xf32>
      %c0_27 = arith.constant 0 : index
      %c0_28 = arith.constant 0 : index
      %29 = vector.load %arg10[%c0_27, %c0_28] : memref<16x32xf32, #tpu.memory_space<vmem>>, vector<16x32xf32>
      tpu.vector_store %arg10[%c0_27, %c0_28], %28 {strides = array<i32>} : memref<16x32xf32, #tpu.memory_space<vmem>>, vector<16x32xf32>,
      %cst_29 = arith.constant 0.000000e+00 : f32
      %30 = vector.broadcast %cst_29 : f32 to vector<16x32xf32>
      %c0_30 = arith.constant 0 : index
      %c0_31 = arith.constant 0 : index
      %31 = vector.load %arg11[%c0_30, %c0_31] : memref<16x32xf32, #tpu.memory_space<vmem>>, vector<16x32xf32>
      tpu.vector_store %arg11[%c0_30, %c0_31], %30 {strides = array<i32>} : memref<16x32xf32, #tpu.memory_space<vmem>>, vector<16x32xf32>,
      %cst_32 = arith.constant 0.000000e+00 : f32
      %32 = vector.broadcast %cst_32 : f32 to vector<16x1xf32>
      %c0_33 = arith.constant 0 : index
      %c0_34 = arith.constant 0 : index
      %33 = vector.load %arg12[%c0_33, %c0_34] : memref<16x1xf32, #tpu.memory_space<vmem>>, vector<16x1xf32>
      tpu.vector_store %arg12[%c0_33, %c0_34], %32 {strides = array<i32>} : memref<16x1xf32, #tpu.memory_space<vmem>>, vector<16x1xf32>,
    } else {
    }
    %c0 = arith.constant 0 : index
    %c0_1 = arith.constant 0 : index
    %3 = vector.load %arg2[%c0, %c0_1] : memref<16x32xf32, #tpu.memory_space<vmem>>, vector<16x32xf32>
    %c0_2 = arith.constant 0 : index
    %c0_3 = arith.constant 0 : index
    %4 = vector.load %arg12[%c0_2, %c0_3] : memref<16x1xf32, #tpu.memory_space<vmem>>, vector<16x1xf32>
    %5 = arith.mulf %3, %3 : vector<16x32xf32>
    %cst = arith.constant dense<0.000000e+00> : vector<16xf32>
    %6 = vector.multi_reduction <add>, %5, %cst [1] : vector<16x32xf32> to vector<16xf32>
    %7 = vector.shape_cast %6 : vector<16xf32> to vector<16x1xf32>
    %8 = arith.addf %4, %7 : vector<16x1xf32>
    %c0_4 = arith.constant 0 : index
    %c0_5 = arith.constant 0 : index
    %9 = vector.load %arg12[%c0_4, %c0_5] : memref<16x1xf32, #tpu.memory_space<vmem>>, vector<16x1xf32>
    tpu.vector_store %arg12[%c0_4, %c0_5], %8 {strides = array<i32>} : memref<16x1xf32, #tpu.memory_space<vmem>>, vector<16x1xf32>,
    %c0_6 = arith.constant 0 : index
    %c0_7 = arith.constant 0 : index
    %10 = vector.load %arg8[%c0_6, %c0_7] : memref<1x32xf32, #tpu.memory_space<vmem>>, vector<1x32xf32>
    %11 = vector.broadcast %10 : vector<1x32xf32> to vector<16x32xf32>
    %12 = arith.mulf %3, %11 : vector<16x32xf32>
    %13 = arith.truncf %12 : vector<16x32xf32> to vector<16x32xbf16>
    %c0_8 = arith.constant 0 : index
    %c0_9 = arith.constant 0 : index
    %14 = vector.load %arg10[%c0_8, %c0_9] : memref<16x32xf32, #tpu.memory_space<vmem>>, vector<16x32xf32>
    %c0_10 = arith.constant 0 : index
    %c0_11 = arith.constant 0 : index
    %15 = vector.load %arg4[%c0_10, %c0_11] : memref<32x32xbf16, #tpu.memory_space<vmem>>, vector<32x32xbf16>
    %cst_12 = arith.constant dense<0.000000e+00> : vector<16x32xf32>
    %16 = tpu.matmul %13, %15, %cst_12 {dimension_numbers = #tpu.dot_dimension_numbers<[1], [0], [0], [1], [0, 0, 1, 1], [], []>} : vector<16x32xbf16>, vector<32x32xbf16>, vector<16x32xf32> -> vector<16x32xf32>
    %17 = arith.addf %14, %16 : vector<16x32xf32>
    %c0_13 = arith.constant 0 : index
    %c0_14 = arith.constant 0 : index
    %18 = vector.load %arg10[%c0_13, %c0_14] : memref<16x32xf32, #tpu.memory_space<vmem>>, vector<16x32xf32>
    tpu.vector_store %arg10[%c0_13, %c0_14], %17 {strides = array<i32>} : memref<16x32xf32, #tpu.memory_space<vmem>>, vector<16x32xf32>,
    %c0_15 = arith.constant 0 : index
    %c0_16 = arith.constant 0 : index
    %19 = vector.load %arg11[%c0_15, %c0_16] : memref<16x32xf32, #tpu.memory_space<vmem>>, vector<16x32xf32>
    %c0_17 = arith.constant 0 : index
    %c0_18 = arith.constant 0 : index
    %20 = vector.load %arg3[%c0_17, %c0_18] : memref<16x32xbf16, #tpu.memory_space<vmem>>, vector<16x32xbf16>
    %c0_19 = arith.constant 0 : index
    %c0_20 = arith.constant 0 : index
    %21 = vector.load %arg5[%c0_19, %c0_20] : memref<32x32xbf16, #tpu.memory_space<vmem>>, vector<32x32xbf16>
    %cst_21 = arith.constant dense<0.000000e+00> : vector<16x32xf32>
    %22 = tpu.matmul %20, %21, %cst_21 {dimension_numbers = #tpu.dot_dimension_numbers<[1], [0], [0], [1], [0, 0, 1, 1], [], []>} : vector<16x32xbf16>, vector<32x32xbf16>, vector<16x32xf32> -> vector<16x32xf32>
    %23 = arith.addf %19, %22 : vector<16x32xf32>
    %c0_22 = arith.constant 0 : index
    %c0_23 = arith.constant 0 : index
    %24 = vector.load %arg11[%c0_22, %c0_23] : memref<16x32xf32, #tpu.memory_space<vmem>>, vector<16x32xf32>
    tpu.vector_store %arg11[%c0_22, %c0_23], %23 {strides = array<i32>} : memref<16x32xf32, #tpu.memory_space<vmem>>, vector<16x32xf32>,
    %c0_i32_24 = arith.constant 0 : i32
    %25 = arith.cmpi eq, %arg1, %c0_i32_24 : i32
    %26 = arith.extui %25 : i1 to i32
    %c0_i32_25 = arith.constant 0 : i32
    %27 = arith.cmpi ne, %26, %c0_i32_25 : i32
    scf.if %27 {
      %c0_26 = arith.constant 0 : index
      %c0_27 = arith.constant 0 : index
      %28 = vector.load %arg12[%c0_26, %c0_27] : memref<16x1xf32, #tpu.memory_space<vmem>>, vector<16x1xf32>
      %cst_28 = arith.constant 3.125000e-02 : f32
      %29 = vector.broadcast %cst_28 : f32 to vector<16x1xf32>
      %30 = arith.mulf %28, %29 : vector<16x1xf32>
      %cst_29 = arith.constant 9.99999997E-7 : f32
      %31 = vector.broadcast %cst_29 : f32 to vector<16x1xf32>
      %32 = arith.addf %30, %31 : vector<16x1xf32>
      %33 = math.rsqrt %32 : vector<16x1xf32>
      %c0_30 = arith.constant 0 : index
      %c0_31 = arith.constant 0 : index
      %34 = vector.load %arg10[%c0_30, %c0_31] : memref<16x32xf32, #tpu.memory_space<vmem>>, vector<16x32xf32>
      %35 = vector.broadcast %33 : vector<16x1xf32> to vector<16x32xf32>
      %36 = arith.mulf %34, %35 : vector<16x32xf32>
      %c0_32 = arith.constant 0 : index
      %c0_33 = arith.constant 0 : index
      %37 = vector.load %arg6[%c0_32, %c0_33] : memref<1x32xf32, #tpu.memory_space<vmem>>, vector<1x32xf32>
      %38 = vector.broadcast %37 : vector<1x32xf32> to vector<16x32xf32>
      %39 = arith.addf %36, %38 : vector<16x32xf32>
      %c0_34 = arith.constant 0 : index
      %c0_35 = arith.constant 0 : index
      %40 = vector.load %arg11[%c0_34, %c0_35] : memref<16x32xf32, #tpu.memory_space<vmem>>, vector<16x32xf32>
      %c0_36 = arith.constant 0 : index
      %c0_37 = arith.constant 0 : index
      %41 = vector.load %arg7[%c0_36, %c0_37] : memref<1x32xf32, #tpu.memory_space<vmem>>, vector<1x32xf32>
      %42 = vector.broadcast %41 : vector<1x32xf32> to vector<16x32xf32>
      %43 = arith.addf %40, %42 : vector<16x32xf32>
      %44 = arith.negf %43 : vector<16x32xf32>
      %45 = math.exp %44 : vector<16x32xf32>
      %cst_38 = arith.constant 1.000000e+00 : f32
      %46 = vector.broadcast %cst_38 : f32 to vector<16x32xf32>
      %47 = arith.addf %46, %45 : vector<16x32xf32>
      %48 = arith.divf %46, %47 : vector<16x32xf32>
      %49 = arith.mulf %43, %48 : vector<16x32xf32>
      %50 = arith.mulf %39, %49 : vector<16x32xf32>
      %c0_39 = arith.constant 0 : index
      %c0_40 = arith.constant 0 : index
      %51 = vector.load %arg9[%c0_39, %c0_40] : memref<16x32xf32, #tpu.memory_space<vmem>>, vector<16x32xf32>
      tpu.vector_store %arg9[%c0_39, %c0_40], %50 {strides = array<i32>} : memref<16x32xf32, #tpu.memory_space<vmem>>, vector<16x32xf32>,
    } else {
    }
    return
  }
  func.func @transform_0(%arg0: i32, %arg1: i32) -> (i32, i32) {
    %c0_i32 = arith.constant 0 : i32
    return %arg0, %arg1 : i32, i32
  }
  func.func @transform_1(%arg0: i32, %arg1: i32) -> (i32, i32) {
    %c0_i32 = arith.constant 0 : i32
    return %arg0, %arg1 : i32, i32
  }
  func.func @transform_2(%arg0: i32, %arg1: i32) -> (i32, i32) {
    %c0_i32 = arith.constant 0 : i32
    %c0_i32_0 = arith.constant 0 : i32
    return %arg1, %c0_i32 : i32, i32
  }
  func.func @transform_3(%arg0: i32, %arg1: i32) -> (i32, i32) {
    %c0_i32 = arith.constant 0 : i32
    %c0_i32_0 = arith.constant 0 : i32
    return %arg1, %c0_i32 : i32, i32
  }
  func.func @transform_4(%arg0: i32, %arg1: i32) -> (i32, i32) {
    %c0_i32 = arith.constant 0 : i32
    %c0_i32_0 = arith.constant 0 : i32
    %c0_i32_1 = arith.constant 0 : i32
    return %c0_i32, %c0_i32_0 : i32, i32
  }
  func.func @transform_5(%arg0: i32, %arg1: i32) -> (i32, i32) {
    %c0_i32 = arith.constant 0 : i32
    %c0_i32_0 = arith.constant 0 : i32
    %c0_i32_1 = arith.constant 0 : i32
    return %c0_i32, %c0_i32_0 : i32, i32
  }
  func.func @transform_6(%arg0: i32, %arg1: i32) -> (i32, i32) {
    %c0_i32 = arith.constant 0 : i32
    %c0_i32_0 = arith.constant 0 : i32
    return %c0_i32, %arg1 : i32, i32
  }
  func.func @transform_7(%arg0: i32, %arg1: i32) -> (i32, i32) {
    %c0_i32 = arith.constant 0 : i32
    %c0_i32_0 = arith.constant 0 : i32
    return %arg0, %c0_i32 : i32, i32
  }
}

</mosaic_0001>

<llo_original>
// kernel: tpu_custom_call.1
$region0: #{tpu_custom_call.1}
  #allocation0 [shape = 'u32[]', space=smem, size = 0x4, offset = 0x4, fixed_abs, tag = 'smem constant byte address 0x4 - core index']
  #allocation1 [shape = 'u32[72,128]{1,0:T(1,128)}', space=vmem, size = 0x9000, scoped, tag = 'internal scratch']
  %s0 = inlined_call_operand.hbm [shape: f32[8,128], index: 0, kind: input, shape index: {}]
  %s1 = inlined_call_operand.hbm [shape: f32[8,128], index: 1, kind: output, shape index: {}]
  %s2 = sld [smem:[#allocation0]]
  $region41: #{tpu_custom_call.1} parent=0
    _
  %s4 = ssub.s32 1, %s2
  %s5 = scalar_select 0, %s4, %s2
  $region1: #{tpu_custom_call.1} parent=0
    #allocation2 [shape = 'u8[4096]{0}', space=vmem, size = 0x1000, scoped, tag = 'input window, operand 0, single buffered']
    #allocation3 [shape = 's32[2]{0}', space=sflag, size = 0x8, scoped, tag = 'scoped memory for tpu_custom_call.1']
    #allocation4 [shape = 's32[2]{0}', space=sflag, size = 0x8, scoped, tag = 'scoped memory for tpu_custom_call.1']
    #allocation5 [shape = 'u8[4096]{0}', space=vmem, size = 0x1000, scoped, tag = 'output window, operand 0, single buffered']
    %6 = vsyncpa [#allocation3], 0
    %7 = vsyncpa [#allocation4], 0
    loop: start=0, step=1, limit=4
    $region2: #{tpu_custom_call.1} parent=1 // loop_pre_header
      _
    $region3: #{tpu_custom_call.1} parent=1 // loop_header
      %s9 = sphi 0, %s13
      %p10 = scmp.ge.s32.totalorder %s9, 4
      %s17 = sphi 0, %s17
      %s19 = sphi 0, %s17
      %s20 = sphi 0, %s19
      %s34 = sphi 0, %s20
      %s38 = sphi 0, %s38
      %s40 = sphi 0, %s38
      %s41 = sphi 0, %s40
      %s55 = sphi 0, %s41
    $region4: #{tpu_custom_call.1} parent=1 // loop_header_branch
      %12 = sbr.rel (%p10) target = $region8
    $region5: #{tpu_custom_call.1} parent=1 // loop_body
      %s14 = ssub.s32 %s9, 1
      %s15 = ssub.s32 %s9, 2
      %s16 = sadd.s32 %s9, 1
      %s18 = sadd.s32 %s17, 1
      %p21 = scmp.eq.s32.totalorder %s9, 1
      %p22 = scmp.ne.s32.totalorder %s17, %s19
      %p23 = scmp.eq.s32.totalorder %s9, 0
      %p24 = por %p22, %p23
      %p25 = scmp.ne.s32.totalorder %s17, %s19
      %p26 = scmp.eq.s32.totalorder %s14, 1
      %p27 = por %p25, %p26
      %p28 = scmp.ne.s32.totalorder %s19, %s20
      %p29 = scmp.eq.s32.totalorder %s14, 0
      %p30 = por %p28, %p29
      %p31 = scmp.ne.s32.totalorder %s19, %s20
      %p32 = scmp.eq.s32.totalorder %s15, 1
      %p33 = por %p31, %p32
      %p35 = scmp.ne.s32.totalorder %s20, %s34
      %p36 = scmp.eq.s32.totalorder %s15, 0
      %p37 = por %p35, %p36
      %s39 = sadd.s32 %s38, 1
      %p42 = scmp.eq.s32.totalorder %s9, 1
      %p43 = scmp.ne.s32.totalorder %s38, %s40
      %p44 = scmp.eq.s32.totalorder %s9, 0
      %p45 = por %p43, %p44
      %p46 = scmp.ne.s32.totalorder %s38, %s40
      %p47 = scmp.eq.s32.totalorder %s14, 1
      %p48 = por %p46, %p47
      %p49 = scmp.ne.s32.totalorder %s40, %s41
      %p50 = scmp.eq.s32.totalorder %s14, 0
      %p51 = por %p49, %p50
      %p52 = scmp.ne.s32.totalorder %s40, %s41
      %p53 = scmp.eq.s32.totalorder %s15, 1
      %p54 = por %p52, %p53
      %p56 = scmp.ne.s32.totalorder %s41, %s55
      %p57 = scmp.eq.s32.totalorder %s15, 0
      %p58 = por %p56, %p57
      %p59 = scmp.le.s32.totalorder 1, %s9
      %p60 = scmp.lt.s32.totalorder %s9, 3
      %p61 = pnand %p59, %p60
      %p62 = pneg %p61
      // Predicated region
      $region9: #{tpu_custom_call.1} parent=5 // pred_check
        _
      $region10: #{tpu_custom_call.1} parent=5 // pred_check_branch
        %64 = sbr.rel (%p61) target = $region12
      $region11: #{tpu_custom_call.1} parent=5 // pred_region
        %s65 = ssub.s32 %s9, 1
        // Predicated region
        $region13: #{tpu_custom_call.1} parent=11 // pred_check
          %p66 = pneg %p30
        $region14: #{tpu_custom_call.1} parent=11 // pred_check_branch
          %68 = sbr.rel (%p66) target = $region16
        $region15: #{tpu_custom_call.1} parent=11 // pred_region
          %70 = vsyncadd [#allocation3], 0
          %s72 = sshll.u32 %s0, 4
          %s73 = int_to_ptr.hbm [resolvable:$true] %s72
          %s74 = sshll.u32 [#allocation2], 4
          %s75 = int_to_ptr.vmem [resolvable:$true] %s74
          %77 = dma.hbm_to_vmem [thread:$0]  %s73, 128, %s75, [#allocation3]
        $region16: #{tpu_custom_call.1} parent=11 // pred_fallthru
          _
      $region12: #{tpu_custom_call.1} parent=5 // pred_fallthru
        _
      %p78 = scmp.lt.s32.totalorder %s9, 2
      // Predicated region
      $region17: #{tpu_custom_call.1} parent=5 // pred_check
        %p79 = pneg %p78
      $region18: #{tpu_custom_call.1} parent=5 // pred_check_branch
        %81 = sbr.rel (%p79) target = $region20
      $region19: #{tpu_custom_call.1} parent=5 // pred_region
        _
      $region20: #{tpu_custom_call.1} parent=5 // pred_fallthru
        _
      %p82 = scmp.le.s32.totalorder 1, %s9
      %p83 = scmp.lt.s32.totalorder %s9, 3
      %p84 = pnand %p82, %p83
      %p85 = pneg %p84
      // Predicated region
      $region21: #{tpu_custom_call.1} parent=5 // pred_check
        _
      $region22: #{tpu_custom_call.1} parent=5 // pred_check_branch
        %87 = sbr.rel (%p84) target = $region24
      $region23: #{tpu_custom_call.1} parent=5 // pred_region
        %s88 = ssub.s32 %s9, 1
        // Predicated region
        $region25: #{tpu_custom_call.1} parent=23 // pred_check
          %p89 = pneg %p30
        $region26: #{tpu_custom_call.1} parent=23 // pred_check_branch
          %91 = sbr.rel (%p89) target = $region28
        $region27: #{tpu_custom_call.1} parent=23 // pred_region
          %93 = dma.done [#allocation3], 128
        $region28: #{tpu_custom_call.1} parent=23 // pred_fallthru
          _
        %p94 = pneg %p30
        %p95 = pneg %p27
        %p96 = pneg %p51
        %p97 = pneg %p48
        %v98 = vld [vmem:[#allocation2] sm:$0xff]
        %v99 = vadd.f32 %v98, 1.0
        %100 = vst [vmem:[#allocation5] sm:$0xff] %v99
        // Predicated region
        $region29: #{tpu_custom_call.1} parent=23 // pred_check
          %p101 = pneg %p48
        $region30: #{tpu_custom_call.1} parent=23 // pred_check_branch
          %103 = sbr.rel (%p101) target = $region32
        $region31: #{tpu_custom_call.1} parent=23 // pred_region
          %105 = vsyncadd [#allocation4], 0
          %s107 = sshll.u32 [#allocation5], 4
          %s108 = int_to_ptr.vmem [resolvable:$true] %s107
          %s109 = sshll.u32 %s1, 4
          %s110 = int_to_ptr.hbm [resolvable:$true] %s109
          %112 = dma.vmem_to_hbm [thread:$0]  %s108, 128, %s110, [#allocation4]
        $region32: #{tpu_custom_call.1} parent=23 // pred_fallthru
          _
        // Predicated region
        $region33: #{tpu_custom_call.1} parent=23 // pred_check
          %p113 = pneg %p48
        $region34: #{tpu_custom_call.1} parent=23 // pred_check_branch
          %115 = sbr.rel (%p113) target = $region36
        $region35: #{tpu_custom_call.1} parent=23 // pred_region
          %117 = dma.done [#allocation4], 128
        $region36: #{tpu_custom_call.1} parent=23 // pred_fallthru
          _
      $region24: #{tpu_custom_call.1} parent=5 // pred_fallthru
        _
      %p118 = scmp.le.s32.totalorder 2, %s9
      // Predicated region
      $region37: #{tpu_custom_call.1} parent=5 // pred_check
        %p119 = pneg %p118
      $region38: #{tpu_custom_call.1} parent=5 // pred_check_branch
        %121 = sbr.rel (%p119) target = $region40
      $region39: #{tpu_custom_call.1} parent=5 // pred_region
        %s122 = ssub.s32 %s9, 2
      $region40: #{tpu_custom_call.1} parent=5 // pred_fallthru
        _
    $region6: #{tpu_custom_call.1} parent=1 // loop_footer
      %s13 = sadd.s32 1, %s9
    $region7: #{tpu_custom_call.1} parent=1 // loop_footer_branch
      %8 = sbr.rel target = $region3
    $region8: #{tpu_custom_call.1} parent=1 // loop_exit
      _
    %123 = vsyncpa [#allocation3], 1
    %s124 = scalar_lea.sflag [#allocation3], 1
    %125 = vsyncpa %s124, 1
    %126 = vsyncpa [#allocation4], 1
    %s127 = scalar_lea.sflag [#allocation4], 1
    %128 = vsyncpa %s127, 1

// kernel: custom-call
$region0: #{custom-call}
  %s0 = inlined_call_operand.hbm [shape: c64[16,32], index: 0, kind: input, shape index: {}]
  %s1 = inlined_call_operand.vmem [shape: f32[16,32], index: 1, kind: output, shape index: {}]
  $region1: #{custom-call} parent=0
    #allocation0 [shape = 's32[1]{0}', space=sflag, size = 0x4, scoped, tag = 'scoped memory for custom-call']
    %2 = vsyncpa [#allocation0], 0
    %s4 = sshll.u32 %s0, 4
    %s5 = int_to_ptr.hbm [resolvable:$true] %s4
    %s6 = sshll.u32 %s1, 4
    %s7 = int_to_ptr.vmem [resolvable:$true] %s6
    %9 = dma.hbm_to_vmem [thread:$0]  %s5, 256, %s7, [#allocation0]
    %11 = dma.done [#allocation0], 256
    %12 = vsyncpa [#allocation0], 1

// kernel: custom-call.1
$region0: #{custom-call.1}
  %s0 = inlined_call_operand.hbm [shape: c64[16,32], index: 0, kind: input, shape index: {}]
  %s1 = inlined_call_operand.vmem [shape: f32[16,32], index: 1, kind: output, shape index: {}]
  %s2 = scalar_lea.hbm %s0, 16
  $region1: #{custom-call.1} parent=0
    #allocation0 [shape = 's32[1]{0}', space=sflag, size = 0x4, scoped, tag = 'scoped memory for custom-call.1']
    %3 = vsyncpa [#allocation0], 0
    %s5 = sshll.u32 %s2, 4
    %s6 = int_to_ptr.hbm [resolvable:$true] %s5
    %s7 = sshll.u32 %s1, 4
    %s8 = int_to_ptr.vmem [resolvable:$true] %s7
    %10 = dma.hbm_to_vmem [thread:$0]  %s6, 256, %s8, [#allocation0]
    %12 = dma.done [#allocation0], 256
    %13 = vsyncpa [#allocation0], 1

// kernel: custom-call.6
$region0: #{custom-call.6}
  %s0 = inlined_call_operand.hbm [shape: c64[8,32], index: 0, kind: input, shape index: {}]
  %s1 = inlined_call_operand.vmem [shape: f32[8,32], index: 1, kind: output, shape index: {}]
  $region1: #{custom-call.6} parent=0
    #allocation0 [shape = 's32[1]{0}', space=sflag, size = 0x4, scoped, tag = 'scoped memory for custom-call.6']
    %2 = vsyncpa [#allocation0], 0
    %s4 = sshll.u32 %s0, 4
    %s5 = int_to_ptr.hbm [resolvable:$true] %s4
    %s6 = sshll.u32 %s1, 4
    %s7 = int_to_ptr.vmem [resolvable:$true] %s6
    %9 = dma.hbm_to_vmem [thread:$0]  %s5, 128, %s7, [#allocation0]
    %11 = dma.done [#allocation0], 128
    %12 = vsyncpa [#allocation0], 1

// kernel: custom-call.7
$region0: #{custom-call.7}
  %s0 = inlined_call_operand.hbm [shape: c64[8,32], index: 0, kind: input, shape index: {}]
  %s1 = inlined_call_operand.vmem [shape: f32[8,32], index: 1, kind: output, shape index: {}]
  %s2 = scalar_lea.hbm %s0, 8
  $region1: #{custom-call.7} parent=0
    #allocation0 [shape = 's32[1]{0}', space=sflag, size = 0x4, scoped, tag = 'scoped memory for custom-call.7']
    %3 = vsyncpa [#allocation0], 0
    %s5 = sshll.u32 %s2, 4
    %s6 = int_to_ptr.hbm [resolvable:$true] %s5
    %s7 = sshll.u32 %s1, 4
    %s8 = int_to_ptr.vmem [resolvable:$true] %s7
    %10 = dma.hbm_to_vmem [thread:$0]  %s6, 128, %s8, [#allocation0]
    %12 = dma.done [#allocation0], 128
    %13 = vsyncpa [#allocation0], 1

// kernel: custom-call.2
$region0: #{custom-call.2}
  %s0 = inlined_call_operand.hbm [shape: c64[32], index: 0, kind: input, shape index: {}]
  %s1 = inlined_call_operand.vmem [shape: f32[32], index: 1, kind: output, shape index: {}]
  $region1: #{custom-call.2} parent=0
    #allocation0 [shape = 's32[1]{0}', space=sflag, size = 0x4, scoped, tag = 'scoped memory for custom-call.2']
    %2 = vsyncpa [#allocation0], 0
    %s4 = sshll.u32 %s0, 4
    %s5 = int_to_ptr.hbm [resolvable:$true] %s4
    %s6 = sshll.u32 %s1, 4
    %s7 = int_to_ptr.vmem [resolvable:$true] %s6
    %9 = dma.hbm_to_vmem [thread:$0]  %s5, 16, %s7, [#allocation0]
    %11 = dma.done [#allocation0], 16
    %12 = vsyncpa [#allocation0], 1

// kernel: custom-call.3
$region0: #{custom-call.3}
  %s0 = inlined_call_operand.hbm [shape: c64[32], index: 0, kind: input, shape index: {}]
  %s1 = inlined_call_operand.vmem [shape: f32[32], index: 1, kind: output, shape index: {}]
  %s2 = scalar_lea.hbm %s0, 1
  $region1: #{custom-call.3} parent=0
    #allocation0 [shape = 's32[1]{0}', space=sflag, size = 0x4, scoped, tag = 'scoped memory for custom-call.3']
    %3 = vsyncpa [#allocation0], 0
    %s5 = sshll.u32 %s2, 4
    %s6 = int_to_ptr.hbm [resolvable:$true] %s5
    %s7 = sshll.u32 %s1, 4
    %s8 = int_to_ptr.vmem [resolvable:$true] %s7
    %10 = dma.hbm_to_vmem [thread:$0]  %s6, 16, %s8, [#allocation0]
    %12 = dma.done [#allocation0], 16
    %13 = vsyncpa [#allocation0], 1

// kernel: sconv_forward.2
$region0: #{sconv_forward.2}
  #allocation0 [shape = 'u32[]', space=smem, size = 0x4, offset = 0x4, fixed_abs, tag = 'smem constant byte address 0x4 - core index']
  #allocation1 [shape = 'u32[72,128]{1,0:T(1,128)}', space=vmem, size = 0x9000, scoped, tag = 'internal scratch']
  #allocation2 [shape = 'f32[16,32]{1,0:T(8,128)}', space=vmem, size = 0x2000, scoped, tag = 'scratch operand']
  #allocation3 [shape = 'f32[16,32]{1,0:T(8,128)}', space=vmem, size = 0x2000, scoped, tag = 'scratch operand']
  %s0 = inlined_call_operand.vmem [shape: bf16[16,32], index: 0, kind: input, shape index: {}]
  %s1 = inlined_call_operand.vmem [shape: bf16[32,32], index: 1, kind: input, shape index: {}]
  %s2 = inlined_call_operand.vmem [shape: bf16[32,32], index: 2, kind: input, shape index: {}]
  %s3 = inlined_call_operand.vmem [shape: f32[1,32], index: 3, kind: input, shape index: {}]
  %s4 = inlined_call_operand.vmem [shape: f32[1,32], index: 4, kind: input, shape index: {}]
  %s5 = inlined_call_operand.vmem [shape: f32[16,32], index: 5, kind: output, shape index: {}]
  %s6 = sld [smem:[#allocation0]]
  $region38: #{sconv_forward.2} parent=0
    _
  %s8 = ssub.s32 1, %s6
  %s9 = scalar_select 0, %s8, %s6
  // Predicated region
  $region2: #{sconv_forward.2} parent=0 // pred_check
    _
  $region3: #{sconv_forward.2} parent=0 // pred_check_branch
    %11 = sbr.rel (0) target = $region5
  $region4: #{sconv_forward.2} parent=0 // pred_region
    _
  $region5: #{sconv_forward.2} parent=0 // pred_fallthru
    _
  // Predicated region
  $region6: #{sconv_forward.2} parent=0 // pred_check
    _
  $region7: #{sconv_forward.2} parent=0 // pred_check_branch
    %13 = sbr.rel (0) target = $region9
  $region8: #{sconv_forward.2} parent=0 // pred_region
    _
  $region9: #{sconv_forward.2} parent=0 // pred_fallthru
    _
  // Predicated region
  $region10: #{sconv_forward.2} parent=0 // pred_check
    _
  $region11: #{sconv_forward.2} parent=0 // pred_check_branch
    %15 = sbr.rel (0) target = $region13
  $region12: #{sconv_forward.2} parent=0 // pred_region
    _
  $region13: #{sconv_forward.2} parent=0 // pred_fallthru
    _
  // Predicated region
  $region14: #{sconv_forward.2} parent=0 // pred_check
    _
  $region15: #{sconv_forward.2} parent=0 // pred_check_branch
    %17 = sbr.rel (0) target = $region17
  $region16: #{sconv_forward.2} parent=0 // pred_region
    _
  $region17: #{sconv_forward.2} parent=0 // pred_fallthru
    _
  // Predicated region
  $region18: #{sconv_forward.2} parent=0 // pred_check
    _
  $region19: #{sconv_forward.2} parent=0 // pred_check_branch
    %19 = sbr.rel (0) target = $region21
  $region20: #{sconv_forward.2} parent=0 // pred_region
    _
  $region21: #{sconv_forward.2} parent=0 // pred_fallthru
    _
  %p21 = scmp.eq.s32.totalorder 0, 0
  // Predicated region
  $region22: #{sconv_forward.2} parent=0 // pred_check
    %p22 = pneg %p21
  $region23: #{sconv_forward.2} parent=0 // pred_check_branch
    %24 = sbr.rel (%p22) target = $region25
  $region24: #{sconv_forward.2} parent=0 // pred_region
    %vm25 = vcmask 261120
    %26 = vst.msk [vmem:[#allocation2] sm:$0xff] %vm25, 0.0
    %27 = vst.msk [vmem:[#allocation2 + $0x8] sm:$0xff] %vm25, 0.0
    %28 = vst.msk [vmem:[#allocation3] sm:$0xff] %vm25, 0.0
    %29 = vst.msk [vmem:[#allocation3 + $0x8] sm:$0xff] %vm25, 0.0
  $region25: #{sconv_forward.2} parent=0 // pred_fallthru
    _
  %v30 = vld [vmem:[%s0] sm:$0xf]
  %v31 = vld [vmem:[%s0 + $0x4] sm:$0xf]
  %v32 = vld [vmem:[#allocation2] sm:$0xff]
  %v33 = vld [vmem:[#allocation2 + $0x8] sm:$0xff]
  %v34 = vld [vmem:[%s1] sm:$0xf]
  %v35 = vld [vmem:[%s1 + $0x4] sm:$0xf]
  %v36 = vld [vmem:[%s1 + $0x8] sm:$0xf]
  %v37 = vld [vmem:[%s1 + $0xc] sm:$0xf]
  %v40 = vunpack.c.l.b16 %v30
  %v41 = vunpack.c.l.b16 %v31
  %v42 = vpack.c.b16 %v41, %v40
  %v47 = vunpack.c.l.b16 %v34
  %v48 = vunpack.c.l.b16 %v35
  %v49 = vunpack.c.l.b16 %v36
  %v50 = vunpack.c.l.b16 %v37
  %v51 = vpack.c.b16 %v48, %v47
  %v52 = vpack.c.b16 %v50, %v49
  %vm55 = vcmask 261120
  %v57 = vsel %vm55, %v42, 0
  %59 = vmatpush.bf16.msra.mxu0 0
  %60 = vmatpush.bf16.msra.mxu0 0
  %61 = vmatpush.bf16.msra.mxu0 0
  %62 = vmatpush.bf16.msra.mxu0 0
  %63 = vmatpush.bf16.msra.mxu0 0
  %64 = vmatpush.bf16.msra.mxu0 0
  %65 = vmatpush.bf16.msra.mxu0 %v52
  %66 = vmatpush.bf16.msra.mxu0 %v51
  %67 = vmatmul.bf16.gmra.mxu0 %v57
  %v68 = vpop.f32.mrf.mxu0
  %v69 = vadd.f32 0.0, %v68
  %v70 = vpop.f32.mrf.mxu0
  %v71 = vadd.f32 0.0, %v70
  %72 = vdwg.mxu0
  %v73 = vadd.f32 %v32, %v69
  %v74 = vadd.f32 %v33, %v71
  %75 = vst.msk [vmem:[#allocation2] sm:$0xff] %vm55, %v73
  %76 = vst.msk [vmem:[#allocation2 + $0x8] sm:$0xff] %vm55, %v74
  %v77 = vld [vmem:[#allocation3] sm:$0xff]
  %v78 = vld [vmem:[#allocation3 + $0x8] sm:$0xff]
  %v79 = vld [vmem:[%s2] sm:$0xf]
  %v80 = vld [vmem:[%s2 + $0x4] sm:$0xf]
  %v81 = vld [vmem:[%s2 + $0x8] sm:$0xf]
  %v82 = vld [vmem:[%s2 + $0xc] sm:$0xf]
  %v87 = vunpack.c.l.b16 %v79
  %v88 = vunpack.c.l.b16 %v80
  %v89 = vunpack.c.l.b16 %v81
  %v90 = vunpack.c.l.b16 %v82
  %v91 = vpack.c.b16 %v88, %v87
  %v92 = vpack.c.b16 %v90, %v89
  %95 = vmatpush.bf16.msra.mxu0 0
  %96 = vmatpush.bf16.msra.mxu0 0
  %97 = vmatpush.bf16.msra.mxu0 0
  %98 = vmatpush.bf16.msra.mxu0 0
  %99 = vmatpush.bf16.msra.mxu0 0
  %100 = vmatpush.bf16.msra.mxu0 0
  %101 = vmatpush.bf16.msra.mxu0 %v92
  %102 = vmatpush.bf16.msra.mxu0 %v91
  %103 = vmatmul.bf16.gmra.mxu0 %v57
  %v104 = vpop.f32.mrf.mxu0
  %v105 = vadd.f32 0.0, %v104
  %v106 = vpop.f32.mrf.mxu0
  %v107 = vadd.f32 0.0, %v106
  %108 = vdwg.mxu0
  %v109 = vadd.f32 %v77, %v105
  %v110 = vadd.f32 %v78, %v107
  %111 = vst.msk [vmem:[#allocation3] sm:$0xff] %vm55, %v109
  %112 = vst.msk [vmem:[#allocation3 + $0x8] sm:$0xff] %vm55, %v110
  // Predicated region
  $region26: #{sconv_forward.2} parent=0 // pred_check
    %p113 = pneg %p21
  $region27: #{sconv_forward.2} parent=0 // pred_check_branch
    %115 = sbr.rel (%p113) target = $region29
  $region28: #{sconv_forward.2} parent=0 // pred_region
    %v116 = vld [vmem:[#allocation2] sm:$0xff]
    %v117 = vld [vmem:[#allocation2 + $0x8] sm:$0xff]
    %v118 = vld [vmem:[%s3] sm:$0x1]
    %v120 = vperm.slane %v118, 0
    %v122 = vadd.f32 %v116, %v120
    %v123 = vadd.f32 %v117, %v120
    %v124 = vld [vmem:[#allocation3] sm:$0xff]
    %v125 = vld [vmem:[#allocation3 + $0x8] sm:$0xff]
    %v126 = vld [vmem:[%s4] sm:$0x1]
    %v128 = vperm.slane %v126, 0
    %v130 = vadd.f32 %v124, %v128
    %v131 = vadd.f32 %v125, %v128
    %v132 = vxor.u32 %v130, 2147483648
    %v133 = vxor.u32 %v131, 2147483648
    %v134 = vmul.f32 %v132, 1.442695
    %v135 = vpow.pop %v134
    %v136 = vmul.f32 %v133, 1.442695
    %v137 = vpow.pop %v136
    %v138 = vadd.f32 %v135, 1.0
    %v139 = vadd.f32 %v137, 1.0
    %v140 = vrcp.pop %v138
    %v141 = vmul.f32 %v138, %v140
    %v142 = vsub.f32 1.0, %v141
    %v143 = vmul.f32 %v140, %v142
    %v144 = vadd.f32 %v140, %v143
    %vm145 = vweird.f32 %v138
    %vm146 = vweird.f32 %v140
    %vm147 = vmor %vm145, %vm146
    %v148 = vsel %vm147, %v140, %v144
    %v149 = vand.u32 2147483647, %v138
    %vm150 = vcmp.eq.f32.partialorder %v149, 8.507059e+37
    %v151 = vand.u32 %v138, 2147483648
    %v152 = vor.u32 1.1754944e-38, %v151
    %v153 = vsel %vm150, %v152, %v148
    %v154 = vmul.f32 1.0, %v153
    %v155 = vrcp.pop %v139
    %v156 = vmul.f32 %v139, %v155
    %v157 = vsub.f32 1.0, %v156
    %v158 = vmul.f32 %v155, %v157
    %v159 = vadd.f32 %v155, %v158
    %vm160 = vweird.f32 %v139
    %vm161 = vweird.f32 %v155
    %vm162 = vmor %vm160, %vm161
    %v163 = vsel %vm162, %v155, %v159
    %v164 = vand.u32 2147483647, %v139
    %vm165 = vcmp.eq.f32.partialorder %v164, 8.507059e+37
    %v166 = vand.u32 %v139, 2147483648
    %v167 = vor.u32 1.1754944e-38, %v166
    %v168 = vsel %vm165, %v167, %v163
    %v169 = vmul.f32 1.0, %v168
    %v170 = vmul.f32 %v130, %v154
    %v171 = vmul.f32 %v131, %v169
    %v172 = vmul.f32 %v122, %v170
    %v173 = vmul.f32 %v123, %v171
    %174 = vst.msk [vmem:[%s5] sm:$0xff] %vm55, %v172
    %175 = vst.msk [vmem:[%s5 + $0x8] sm:$0xff] %vm55, %v173
  $region29: #{sconv_forward.2} parent=0 // pred_fallthru
    _
  // Predicated region
  $region30: #{sconv_forward.2} parent=0 // pred_check
    _
  $region31: #{sconv_forward.2} parent=0 // pred_check_branch
    %177 = sbr.rel (0) target = $region33
  $region32: #{sconv_forward.2} parent=0 // pred_region
    _
  $region33: #{sconv_forward.2} parent=0 // pred_fallthru
    _
  // Predicated region
  $region34: #{sconv_forward.2} parent=0 // pred_check
    _
  $region35: #{sconv_forward.2} parent=0 // pred_check_branch
    %179 = sbr.rel (0) target = $region37
  $region36: #{sconv_forward.2} parent=0 // pred_region
    _
  $region37: #{sconv_forward.2} parent=0 // pred_fallthru
    _

// kernel: sconv_forward.3
$region0: #{sconv_forward.3}
  #allocation0 [shape = 'u32[]', space=smem, size = 0x4, offset = 0x4, fixed_abs, tag = 'smem constant byte address 0x4 - core index']
  #allocation1 [shape = 'u32[72,128]{1,0:T(1,128)}', space=vmem, size = 0x9000, scoped, tag = 'internal scratch']
  #allocation2 [shape = 'f32[16,32]{1,0:T(8,128)}', space=vmem, size = 0x2000, scoped, tag = 'scratch operand']
  #allocation3 [shape = 'f32[16,32]{1,0:T(8,128)}', space=vmem, size = 0x2000, scoped, tag = 'scratch operand']
  #allocation4 [shape = 'f32[16,1]{1,0:T(8,128)}', space=vmem, size = 0x2000, scoped, tag = 'scratch operand']
  %s0 = inlined_call_operand.vmem [shape: f32[16,32], index: 0, kind: input, shape index: {}]
  %s1 = inlined_call_operand.vmem [shape: bf16[16,32], index: 1, kind: input, shape index: {}]
  %s2 = inlined_call_operand.vmem [shape: bf16[32,32], index: 2, kind: input, shape index: {}]
  %s3 = inlined_call_operand.vmem [shape: bf16[32,32], index: 3, kind: input, shape index: {}]
  %s4 = inlined_call_operand.vmem [shape: f32[1,32], index: 4, kind: input, shape index: {}]
  %s5 = inlined_call_operand.vmem [shape: f32[1,32], index: 5, kind: input, shape index: {}]
  %s6 = inlined_call_operand.vmem [shape: f32[1,32], index: 6, kind: input, shape index: {}]
  %s7 = inlined_call_operand.hbm [shape: f32[16,32], index: 7, kind: output, shape index: {}]
  %s8 = sld [smem:[#allocation0]]
  $region46: #{sconv_forward.3} parent=0
    _
  %s10 = ssub.s32 1, %s8
  %s11 = scalar_select 0, %s10, %s8
  $region1: #{sconv_forward.3} parent=0
    #allocation5 [shape = 'u8[8192]{0}', space=vmem, size = 0x2000, scoped, tag = 'output window, operand 0, single buffered']
    #allocation6 [shape = 's32[1]{0}', space=sflag, size = 0x4, scoped, tag = 'scoped memory for sconv_forward.3']
    %12 = vsyncpa [#allocation6], 0
    // Predicated region
    $region2: #{sconv_forward.3} parent=1 // pred_check
      _
    $region3: #{sconv_forward.3} parent=1 // pred_check_branch
      %14 = sbr.rel (0) target = $region5
    $region4: #{sconv_forward.3} parent=1 // pred_region
      _
    $region5: #{sconv_forward.3} parent=1 // pred_fallthru
      _
    // Predicated region
    $region6: #{sconv_forward.3} parent=1 // pred_check
      _
    $region7: #{sconv_forward.3} parent=1 // pred_check_branch
      %16 = sbr.rel (0) target = $region9
    $region8: #{sconv_forward.3} parent=1 // pred_region
      _
    $region9: #{sconv_forward.3} parent=1 // pred_fallthru
      _
    // Predicated region
    $region10: #{sconv_forward.3} parent=1 // pred_check
      _
    $region11: #{sconv_forward.3} parent=1 // pred_check_branch
      %18 = sbr.rel (0) target = $region13
    $region12: #{sconv_forward.3} parent=1 // pred_region
      _
    $region13: #{sconv_forward.3} parent=1 // pred_fallthru
      _
    // Predicated region
    $region14: #{sconv_forward.3} parent=1 // pred_check
      _
    $region15: #{sconv_forward.3} parent=1 // pred_check_branch
      %20 = sbr.rel (0) target = $region17
    $region16: #{sconv_forward.3} parent=1 // pred_region
      _
    $region17: #{sconv_forward.3} parent=1 // pred_fallthru
      _
    // Predicated region
    $region18: #{sconv_forward.3} parent=1 // pred_check
      _
    $region19: #{sconv_forward.3} parent=1 // pred_check_branch
      %22 = sbr.rel (0) target = $region21
    $region20: #{sconv_forward.3} parent=1 // pred_region
      _
    $region21: #{sconv_forward.3} parent=1 // pred_fallthru
      _
    // Predicated region
    $region22: #{sconv_forward.3} parent=1 // pred_check
      _
    $region23: #{sconv_forward.3} parent=1 // pred_check_branch
      %24 = sbr.rel (0) target = $region25
    $region24: #{sconv_forward.3} parent=1 // pred_region
      _
    $region25: #{sconv_forward.3} parent=1 // pred_fallthru
      _
    // Predicated region
    $region26: #{sconv_forward.3} parent=1 // pred_check
      _
    $region27: #{sconv_forward.3} parent=1 // pred_check_branch
      %26 = sbr.rel (0) target = $region29
    $region28: #{sconv_forward.3} parent=1 // pred_region
      _
    $region29: #{sconv_forward.3} parent=1 // pred_fallthru
      _
    %p28 = scmp.eq.s32.totalorder 0, 0
    // Predicated region
    $region30: #{sconv_forward.3} parent=1 // pred_check
      %p29 = pneg %p28
    $region31: #{sconv_forward.3} parent=1 // pred_check_branch
      %31 = sbr.rel (%p29) target = $region33
    $region32: #{sconv_forward.3} parent=1 // pred_region
      %vm32 = vcmask 261120
      %33 = vst.msk [vmem:[#allocation2] sm:$0xff] %vm32, 0.0
      %34 = vst.msk [vmem:[#allocation2 + $0x8] sm:$0xff] %vm32, 0.0
      %35 = vst.msk [vmem:[#allocation3] sm:$0xff] %vm32, 0.0
      %36 = vst.msk [vmem:[#allocation3 + $0x8] sm:$0xff] %vm32, 0.0
      %vm37 = vcmask 7168
      %38 = vst.msk [vmem:[#allocation4] sm:$0xff] %vm37, 0.0
      %39 = vst.msk [vmem:[#allocation4 + $0x8] sm:$0xff] %vm37, 0.0
    $region33: #{sconv_forward.3} parent=1 // pred_fallthru
      _
    %v40 = vld [vmem:[%s0] sm:$0xff]
    %v41 = vld [vmem:[%s0 + $0x8] sm:$0xff]
    %v42 = vld [vmem:[#allocation4] sm:$0xff]
    %v43 = vld [vmem:[#allocation4 + $0x8] sm:$0xff]
    %v44 = vmul.f32 %v40, %v40
    %v45 = vmul.f32 %v41, %v41
    %vm46 = vcmask 261120
    %v47 = vsel %vm46, %v44, 0.0
    %48 = vadd.xlane.f32.xlu0 %v47
    %v49 = vpop.xlane.xlu0 %48
    %v50 = vsel %vm46, %v45, 0.0
    %51 = vadd.xlane.f32.xlu0 %v50
    %v52 = vpop.xlane.xlu0 %51
    %v53 = vadd.f32 %v42, %v49
    %v54 = vadd.f32 %v43, %v52
    %vm55 = vcmask 7168
    %56 = vst.msk [vmem:[#allocation4] sm:$0xff] %vm55, %v53
    %57 = vst.msk [vmem:[#allocation4 + $0x8] sm:$0xff] %vm55, %v54
    %v58 = vld [vmem:[%s6] sm:$0x1]
    %v60 = vperm.slane %v58, 0
    %v62 = vmul.f32 %v40, %v60
    %v63 = vmul.f32 %v41, %v60
    %v64 = vpack.c.bf16 %v63, %v62
    %v65 = vld [vmem:[#allocation2] sm:$0xff]
    %v66 = vld [vmem:[#allocation2 + $0x8] sm:$0xff]
    %v67 = vld [vmem:[%s2] sm:$0xf]
    %v68 = vld [vmem:[%s2 + $0x4] sm:$0xf]
    %v69 = vld [vmem:[%s2 + $0x8] sm:$0xf]
    %v70 = vld [vmem:[%s2 + $0xc] sm:$0xf]
    %v75 = vunpack.c.l.b16 %v67
    %v76 = vunpack.c.l.b16 %v68
    %v77 = vunpack.c.l.b16 %v69
    %v78 = vunpack.c.l.b16 %v70
    %v79 = vpack.c.b16 %v76, %v75
    %v80 = vpack.c.b16 %v78, %v77
    %v84 = vsel %vm46, %v64, 0
    %86 = vmatpush.bf16.msra.mxu0 0
    %87 = vmatpush.bf16.msra.mxu0 0
    %88 = vmatpush.bf16.msra.mxu0 0
    %89 = vmatpush.bf16.msra.mxu0 0
    %90 = vmatpush.bf16.msra.mxu0 0
    %91 = vmatpush.bf16.msra.mxu0 0
    %92 = vmatpush.bf16.msra.mxu0 %v80
    %93 = vmatpush.bf16.msra.mxu0 %v79
    %94 = vmatmul.bf16.gmra.mxu0 %v84
    %v95 = vpop.f32.mrf.mxu0
    %v96 = vadd.f32 0.0, %v95
    %v97 = vpop.f32.mrf.mxu0
    %v98 = vadd.f32 0.0, %v97
    %99 = vdwg.mxu0
    %v100 = vadd.f32 %v65, %v96
    %v101 = vadd.f32 %v66, %v98
    %102 = vst.msk [vmem:[#allocation2] sm:$0xff] %vm46, %v100
    %103 = vst.msk [vmem:[#allocation2 + $0x8] sm:$0xff] %vm46, %v101
    %v104 = vld [vmem:[#allocation3] sm:$0xff]
    %v105 = vld [vmem:[#allocation3 + $0x8] sm:$0xff]
    %v106 = vld [vmem:[%s1] sm:$0xf]
    %v107 = vld [vmem:[%s1 + $0x4] sm:$0xf]
    %v108 = vld [vmem:[%s3] sm:$0xf]
    %v109 = vld [vmem:[%s3 + $0x4] sm:$0xf]
    %v110 = vld [vmem:[%s3 + $0x8] sm:$0xf]
    %v111 = vld [vmem:[%s3 + $0xc] sm:$0xf]
    %v114 = vunpack.c.l.b16 %v106
    %v115 = vunpack.c.l.b16 %v107
    %v116 = vpack.c.b16 %v115, %v114
    %v121 = vunpack.c.l.b16 %v108
    %v122 = vunpack.c.l.b16 %v109
    %v123 = vunpack.c.l.b16 %v110
    %v124 = vunpack.c.l.b16 %v111
    %v125 = vpack.c.b16 %v122, %v121
    %v126 = vpack.c.b16 %v124, %v123
    %v130 = vsel %vm46, %v116, 0
    %132 = vmatpush.bf16.msra.mxu0 0
    %133 = vmatpush.bf16.msra.mxu0 0
    %134 = vmatpush.bf16.msra.mxu0 0
    %135 = vmatpush.bf16.msra.mxu0 0
    %136 = vmatpush.bf16.msra.mxu0 0
    %137 = vmatpush.bf16.msra.mxu0 0
    %138 = vmatpush.bf16.msra.mxu0 %v126
    %139 = vmatpush.bf16.msra.mxu0 %v125
    %140 = vmatmul.bf16.gmra.mxu0 %v130
    %v141 = vpop.f32.mrf.mxu0
    %v142 = vadd.f32 0.0, %v141
    %v143 = vpop.f32.mrf.mxu0
    %v144 = vadd.f32 0.0, %v143
    %145 = vdwg.mxu0
    %v146 = vadd.f32 %v104, %v142
    %v147 = vadd.f32 %v105, %v144
    %148 = vst.msk [vmem:[#allocation3] sm:$0xff] %vm46, %v146
    %149 = vst.msk [vmem:[#allocation3 + $0x8] sm:$0xff] %vm46, %v147
    // Predicated region
    $region34: #{sconv_forward.3} parent=1 // pred_check
      %p150 = pneg %p28
    $region35: #{sconv_forward.3} parent=1 // pred_check_branch
      %152 = sbr.rel (%p150) target = $region37
    $region36: #{sconv_forward.3} parent=1 // pred_region
      %v153 = vld [vmem:[#allocation4] sm:$0xff]
      %v154 = vld [vmem:[#allocation4 + $0x8] sm:$0xff]
      %v155 = vmul.f32 %v153, 0.03125
      %v156 = vmul.f32 %v154, 0.03125
      %v157 = vadd.f32 %v155, 1e-06
      %v158 = vadd.f32 %v156, 1e-06
      %v159 = vrsqrt.pop %v157
      %v160 = vmul.f32 %v159, %v157
      %v161 = vmul.f32 %v160, %v159
      %v162 = vmul.f32 0.5, %v161
      %v163 = vsub.f32 1.5, %v162
      %v164 = vmul.f32 %v159, %v163
      %vm165 = vweird.f32 %v157
      %vm166 = vweird.f32 %v159
      %vm167 = vmor %vm165, %vm166
      %v168 = vsel %vm167, %v159, %v164
      %v169 = vrsqrt.pop %v158
      %v170 = vmul.f32 %v169, %v158
      %v171 = vmul.f32 %v170, %v169
      %v172 = vmul.f32 0.5, %v171
      %v173 = vsub.f32 1.5, %v172
      %v174 = vmul.f32 %v169, %v173
      %vm175 = vweird.f32 %v158
      %vm176 = vweird.f32 %v169
      %vm177 = vmor %vm175, %vm176
      %v178 = vsel %vm177, %v169, %v174
      %v179 = vld [vmem:[#allocation2] sm:$0xff]
      %v180 = vld [vmem:[#allocation2 + $0x8] sm:$0xff]
      %182 = vset.pattern.permute.xlu0 0
      %183 = vperm.xlu0 %182, %v168
      %v184 = vpop.permute.xlu0 %183
      %187 = vset.pattern.permute.xlu0 0
      %188 = vperm.xlu0 %187, %v178
      %v189 = vpop.permute.xlu0 %188
      %v191 = vmul.f32 %v179, %v184
      %v192 = vmul.f32 %v180, %v189
      %v193 = vld [vmem:[%s4] sm:$0x1]
      %v195 = vperm.slane %v193, 0
      %v197 = vadd.f32 %v191, %v195
      %v198 = vadd.f32 %v192, %v195
      %v199 = vld [vmem:[#allocation3] sm:$0xff]
      %v200 = vld [vmem:[#allocation3 + $0x8] sm:$0xff]
      %v201 = vld [vmem:[%s5] sm:$0x1]
      %v203 = vperm.slane %v201, 0
      %v205 = vadd.f32 %v199, %v203
      %v206 = vadd.f32 %v200, %v203
      %v207 = vxor.u32 %v205, 2147483648
      %v208 = vxor.u32 %v206, 2147483648
      %v209 = vmul.f32 %v207, 1.442695
      %v210 = vpow.pop %v209
      %v211 = vmul.f32 %v208, 1.442695
      %v212 = vpow.pop %v211
      %v213 = vadd.f32 %v210, 1.0
      %v214 = vadd.f32 %v212, 1.0
      %v215 = vrcp.pop %v213
      %v216 = vmul.f32 %v213, %v215
      %v217 = vsub.f32 1.0, %v216
      %v218 = vmul.f32 %v215, %v217
      %v219 = vadd.f32 %v215, %v218
      %vm220 = vweird.f32 %v213
      %vm221 = vweird.f32 %v215
      %vm222 = vmor %vm220, %vm221
      %v223 = vsel %vm222, %v215, %v219
      %v224 = vand.u32 2147483647, %v213
      %vm225 = vcmp.eq.f32.partialorder %v224, 8.507059e+37
      %v226 = vand.u32 %v213, 2147483648
      %v227 = vor.u32 1.1754944e-38, %v226
      %v228 = vsel %vm225, %v227, %v223
      %v229 = vmul.f32 1.0, %v228
      %v230 = vrcp.pop %v214
      %v231 = vmul.f32 %v214, %v230
      %v232 = vsub.f32 1.0, %v231
      %v233 = vmul.f32 %v230, %v232
      %v234 = vadd.f32 %v230, %v233
      %vm235 = vweird.f32 %v214
      %vm236 = vweird.f32 %v230
      %vm237 = vmor %vm235, %vm236
      %v238 = vsel %vm237, %v230, %v234
      %v239 = vand.u32 2147483647, %v214
      %vm240 = vcmp.eq.f32.partialorder %v239, 8.507059e+37
      %v241 = vand.u32 %v214, 2147483648
      %v242 = vor.u32 1.1754944e-38, %v241
      %v243 = vsel %vm240, %v242, %v238
      %v244 = vmul.f32 1.0, %v243
      %v245 = vmul.f32 %v205, %v229
      %v246 = vmul.f32 %v206, %v244
      %v247 = vmul.f32 %v197, %v245
      %v248 = vmul.f32 %v198, %v246
      %249 = vst.msk [vmem:[#allocation5] sm:$0xff] %vm46, %v247
      %250 = vst.msk [vmem:[#allocation5 + $0x8] sm:$0xff] %vm46, %v248
    $region37: #{sconv_forward.3} parent=1 // pred_fallthru
      _
    // Predicated region
    $region38: #{sconv_forward.3} parent=1 // pred_check
      _
    $region39: #{sconv_forward.3} parent=1 // pred_check_branch
      %252 = sbr.rel (0) target = $region41
    $region40: #{sconv_forward.3} parent=1 // pred_region
      %254 = vsyncadd [#allocation6], 0
      %s255 = sshll.u32 [#allocation5], 4
      %s256 = int_to_ptr.vmem [resolvable:$true] %s255
      %s257 = sshll.u32 %s7, 4
      %s258 = int_to_ptr.hbm [resolvable:$true] %s257
      %263 = dma.vmem_to_hbm [thread:$0]  %s256, 256, %s258, [#allocation6], 128, 128, 8
    $region41: #{sconv_forward.3} parent=1 // pred_fallthru
      _
    // Predicated region
    $region42: #{sconv_forward.3} parent=1 // pred_check
      _
    $region43: #{sconv_forward.3} parent=1 // pred_check_branch
      %265 = sbr.rel (0) target = $region45
    $region44: #{sconv_forward.3} parent=1 // pred_region
      %267 = dma.done [#allocation6], 256
    $region45: #{sconv_forward.3} parent=1 // pred_fallthru
      _
    %268 = vsyncpa [#allocation6], 1

</llo_original>
